<compile_context>
chip_gen: v5e
topology: v5e:2x2
jax: 0.10.0
libtpu: 0.0.40
codegen_flags: <defaults>
</compile_context>

<pallas_src>
import functools

import numpy as np
import jax
import jax.numpy as jnp
from jax.experimental import pallas as pl
from jax.experimental.pallas import tpu as pltpu


def _round_up(v, m):
    return ((v + m - 1) // m) * m


@functools.lru_cache(maxsize=None)
def _dft_bases(D, K2, J):
    """Shape-only DFT constants, built once per (D, K2, J) on the host."""
    # forward DFT (first K2 frequencies), stacked rows [cos ; -sin] -> [2*K2, D]
    k = np.arange(K2, dtype=np.int64)
    d = np.arange(D, dtype=np.int64)
    ang_f = (-2.0 * np.pi / D) * ((k[:, None] * d[None, :]) % D)
    a2 = np.concatenate([np.cos(ang_f), np.sin(ang_f)], axis=0)
    # inverse-DFT basis rows j < J:  E[j, n] = exp(+2i*pi*j*n/D) / D
    j = np.arange(J, dtype=np.int64)
    n = np.arange(D, dtype=np.int64)
    ang_i = (2.0 * np.pi / D) * ((j[:, None] * n[None, :]) % D)
    e_re = np.cos(ang_i) / D
    e_im = np.sin(ang_i) / D
    return a2, e_re, e_im


def _make_kernel(Bt, dvp, K2):
    def kernel(xt_ref, a2_ref, ew_ref, c_ref, o_ref):
        # xt_ref : [D, Bt*dvp]   bf16  activations, lanes = (batch, seq-row)
        # a2_ref : [2*K2, D]     bf16  forward DFT, rows = (re k | im k)
        # ew_ref : [2*dvp, 2*D]  f32   Linear W folded into the D-axis inv DFT
        # c_ref  : [1, 2*D]      f32   bias spectrum (re | im)
        # o_ref  : [Bt*K2, 2*D]  f32   H[b, k, :] = [re | im], lane dense
        ft = jnp.dot(a2_ref[...], xt_ref[...],
                     preferred_element_type=jnp.float32)       # [2*K2, Bt*dvp]
        # Re-block per batch: rows (b, k), lanes (re s | im s).  Only data
        # movement between the two MXU passes (~Bt*K2*2*dvp floats).
        parts = []
        for bb in range(Bt):
            fr = ft[:K2, bb * dvp:(bb + 1) * dvp]
            fi = ft[K2:, bb * dvp:(bb + 1) * dvp]
            parts.append(jnp.concatenate([fr, fi], axis=1))    # [K2, 2*dvp]
        lhs = parts[0] if Bt == 1 else jnp.concatenate(parts, axis=0)
        o_ref[...] = (jnp.dot(lhs, ew_ref[...],
                              preferred_element_type=jnp.float32)
                      + c_ref[...])
    return kernel


def _pick_bt(B, dvp, K2, D, cd_bytes):
    """Largest Bt with Bt | B, a legal lane width, and blocks within budget."""
    budget = 8 << 20  # per-step in+out blocks, double buffered

    def grp_bytes(bt):
        return 2 * (D * bt * dvp * cd_bytes) + 2 * (bt * K2 * 2 * D * 4)

    legal = [bt for bt in range(1, B + 1)
             if B % bt == 0 and ((bt * dvp) % 128 == 0 or bt == B)]
    fit = [bt for bt in legal if grp_bytes(bt) <= budget]
    pool = fit if fit else [min(legal)]
    # prefer >= 2 grid steps (v7x megacore) when each step keeps enough rows
    multi = [bt for bt in pool if B // bt >= 2 and bt * K2 >= 256]
    return max(multi) if multi else max(pool)


def _build_call(kernel, *, G, B, Bt, dvp, K2, D, cd, buffered):
    extra = {"pipeline_mode": pl.Buffered(1)} if buffered else {}
    in_specs = [
        pl.BlockSpec((D, Bt * dvp), lambda i: (0, i)),               # activations
        pl.BlockSpec((2 * K2, D), lambda i: (0, 0), **extra),        # fwd DFT
        pl.BlockSpec((2 * dvp, 2 * D), lambda i: (0, 0), **extra),   # W * inv DFT
        pl.BlockSpec((1, 2 * D), lambda i: (0, 0), **extra),         # bias spectrum
    ]
    out_specs = pl.BlockSpec((Bt * K2, 2 * D), lambda i: (i, 0))

    cdb = jnp.dtype(cd).itemsize
    resident = 2 * K2 * D * cdb + 2 * dvp * 2 * D * 4 + 8 * 2 * D * 4
    resident *= 1 if buffered else 2
    pipelined = 2 * (D * Bt * dvp * cdb) + 2 * (Bt * K2 * 2 * D * 4)
    vmem_limit = int(min(64 << 20, max(32 << 20, 2 * (resident + pipelined))))

    cost = pl.CostEstimate(
        flops=2 * (2 * K2) * D * (B * dvp) + 2 * (B * K2) * (2 * dvp) * (2 * D),
        transcendentals=0,
        bytes_accessed=(D * B * dvp * cdb + 2 * K2 * D * cdb
                        + 2 * dvp * 2 * D * 4 + 2 * D * 4
                        + B * K2 * 2 * D * 4),
    )
    return pl.pallas_call(
        kernel,
        out_shape=jax.ShapeDtypeStruct((B * K2, 2 * D), jnp.float32),
        grid=(G,),
        in_specs=in_specs,
        out_specs=out_specs,
        compiler_params=pltpu.CompilerParams(
            dimension_semantics=("parallel",),
            vmem_limit_bytes=vmem_limit),
        cost_estimate=cost,
    )


def fourier_layer(x, w, b, dv, *, compute_dtype=jnp.bfloat16):
    """x: [B, S, D] float -> complex64 [B, S, D] (same as the torch forward)."""
    B, S, D = x.shape
    if dv > S:
        raise ValueError(f"dv={dv} must be <= sequence length S={S}")

    cd = compute_dtype
    J = min(dv, D)                        # inverse-DFT rows that actually exist
    K2 = min(_round_up(min(S, D), 8), D)  # frequencies needed by the S-axis ifft
    dvp = min(_round_up(dv, 8), S)        # sublane-padded number of seq rows

    a2_np, e_re_np, e_im_np = _dft_bases(D, K2, J)       # cached per shape
    a2 = jnp.asarray(a2_np, cd)                          # [2*K2, D]

    # Fold Linear(dv, dv) into the D-axis inverse DFT (tiny per-call matmuls).
    w32 = jnp.asarray(w, jnp.float32)
    b32 = jnp.asarray(b, jnp.float32)
    e_re = jnp.asarray(e_re_np, jnp.float32)
    e_im = jnp.asarray(e_im_np, jnp.float32)
    p_re = w32[:J, :].T @ e_re                           # [dv, D]
    p_im = w32[:J, :].T @ e_im
    if dvp > dv:
        pad = ((0, dvp - dv), (0, 0))
        p_re = jnp.pad(p_re, pad)
        p_im = jnp.pad(p_im, pad)
    ew = jnp.concatenate(
        [jnp.concatenate([p_re, p_im], axis=1),
         jnp.concatenate([-p_im, p_re], axis=1)], axis=0)          # [2*dvp, 2*D]
    c = jnp.concatenate([b32[:J] @ e_re, b32[:J] @ e_im])[None, :]  # [1, 2*D]

    # Only the first dvp sequence rows matter; lay them out [D, B*dvp] so the
    # kernel needs no in-kernel transpose (small XLA slice+transpose+cast).
    xt = jnp.transpose(x[:, :dvp, :], (2, 0, 1)).reshape(D, B * dvp).astype(cd)

    Bt = _pick_bt(B, dvp, K2, D, jnp.dtype(cd).itemsize)
    G = B // Bt
    kernel = _make_kernel(Bt, dvp, K2)

    try:
        call = _build_call(kernel, G=G, B=B, Bt=Bt, dvp=dvp, K2=K2, D=D,
                           cd=cd, buffered=True)
        out2d = call(xt, a2, ew, c)
    except Exception:
        # Graceful fallback for JAX versions without Buffered(1) support.
        call = _build_call(kernel, G=G, B=B, Bt=Bt, dvp=dvp, K2=K2, D=D,
                           cd=cd, buffered=False)
        out2d = call(xt, a2, ew, c)

    h = out2d.reshape(B, K2, 2 * D)
    y = jax.lax.complex(h[..., :D], h[..., D:])          # [B, K2, D] complex64
    # Remaining inverse transforms (no Pallas FFT primitive): S axis (crops /
    # zero-pads the K2 computed frequencies) and batch axis.
    y = jnp.fft.ifft(y, n=S, axis=1)
    y = jnp.fft.ifft(y, n=B, axis=0)
    return y


def fourier_layer_ref(x, w, b, dv):
    # pure-JAX reference mirroring the (interpreted) torch forward
    f = jnp.fft.fft(x.astype(jnp.float32))
    f = jnp.transpose(f[:, :dv, :], (0, 2, 1))
    f = f @ w.T.astype(jnp.complex64) + b.astype(jnp.complex64)
    return jnp.fft.ifftn(f, s=x.shape)


if __name__ == "__main__":
    B, S, D = 2, 16, 128
    dv = 8

    key = jax.random.PRNGKey(0)
    kx, kw, kb = jax.random.split(key, 3)
    x = jax.random.normal(kx, (B, S, D), dtype=jnp.float32)
    bound = 1.0 / float(np.sqrt(dv))   # nn.Linear default init range
    w = jax.random.uniform(kw, (dv, dv), jnp.float32, -bound, bound)
    b = jax.random.uniform(kb, (dv,), jnp.float32, -bound, bound)

    out = jax.block_until_ready(fourier_layer(x, w, b, dv))
    ref = fourier_layer_ref(x, w, b, dv)

    assert out.shape == (B, S, D) and out.dtype == jnp.complex64
    err = float(jnp.max(jnp.abs(out - ref)))
    scale = float(jnp.max(jnp.abs(ref)))
    # bf16 MXU inputs with f32 accumulation: scale-aware slack.
    assert err < 2e-3 + 1e-2 * scale, f"mismatch vs reference: err={err} scale={scale}"

    print("KERNEL_OK")
</pallas_src>

<mosaic_0001>
module attributes {stable_mosaic.version = 11 : i64} {
  func.func @kernel(%arg0: i32, %arg1: memref<128x16xbf16, #tpu.memory_space<vmem>>, %arg2: memref<32x128xbf16, #tpu.memory_space<vmem>>, %arg3: memref<16x256xf32, #tpu.memory_space<vmem>>, %arg4: memref<1x256xf32, #tpu.memory_space<vmem>>, %arg5: memref<32x256xf32, #tpu.memory_space<vmem>>) attributes {dimension_semantics = [#tpu.dimension_semantics<parallel>], iteration_bounds = array<i64: 1>, scalar_prefetch = 0 : i64, scratch_operands = 0 : i64, tpu.core_type = #tpu.core_type<tc>, window_params = [{transform_indices = @transform_0, window_bounds = array<i64: 128, 16>}, {pipeline_mode = #tpu.pipeline_mode<synchronous>, transform_indices = @transform_1, window_bounds = array<i64: 32, 128>}, {pipeline_mode = #tpu.pipeline_mode<synchronous>, transform_indices = @transform_2, window_bounds = array<i64: 16, 256>}, {pipeline_mode = #tpu.pipeline_mode<synchronous>, transform_indices = @transform_3, window_bounds = array<i64: 1, 256>}, {transform_indices = @transform_4, window_bounds = array<i64: 32, 256>}]} {
    %c0 = arith.constant 0 : index
    %c0_0 = arith.constant 0 : index
    %0 = vector.load %arg2[%c0, %c0_0] : memref<32x128xbf16, #tpu.memory_space<vmem>>, vector<32x128xbf16>
    %c0_1 = arith.constant 0 : index
    %c0_2 = arith.constant 0 : index
    %1 = vector.load %arg1[%c0_1, %c0_2] : memref<128x16xbf16, #tpu.memory_space<vmem>>, vector<128x16xbf16>
    %cst = arith.constant dense<0.000000e+00> : vector<32x16xf32>
    %2 = tpu.matmul %0, %1, %cst {dimension_numbers = #tpu.dot_dimension_numbers<[1], [0], [0], [1], [0, 0, 1, 1], [], []>} : vector<32x128xbf16>, vector<128x16xbf16>, vector<32x16xf32> -> vector<32x16xf32>
    %3 = vector.extract_strided_slice %2 {offsets = [0, 0], sizes = [16, 8], strides = [1, 1]} : vector<32x16xf32> to vector<16x8xf32>
    %4 = vector.extract_strided_slice %2 {offsets = [16, 0], sizes = [16, 8], strides = [1, 1]} : vector<32x16xf32> to vector<16x8xf32>
    %5 = tpu.concatenate %3, %4 in 1 : vector<16x8xf32>, vector<16x8xf32> -> vector<16x16xf32>
    %6 = vector.extract_strided_slice %2 {offsets = [0, 8], sizes = [16, 8], strides = [1, 1]} : vector<32x16xf32> to vector<16x8xf32>
    %7 = vector.extract_strided_slice %2 {offsets = [16, 8], sizes = [16, 8], strides = [1, 1]} : vector<32x16xf32> to vector<16x8xf32>
    %8 = tpu.concatenate %6, %7 in 1 : vector<16x8xf32>, vector<16x8xf32> -> vector<16x16xf32>
    %9 = tpu.concatenate %5, %8 in 0 : vector<16x16xf32>, vector<16x16xf32> -> vector<32x16xf32>
    %c0_3 = arith.constant 0 : index
    %c0_4 = arith.constant 0 : index
    %10 = vector.load %arg3[%c0_3, %c0_4] : memref<16x256xf32, #tpu.memory_space<vmem>>, vector<16x256xf32>
    %cst_5 = arith.constant dense<0.000000e+00> : vector<32x256xf32>
    %11 = tpu.matmul %9, %10, %cst_5 {dimension_numbers = #tpu.dot_dimension_numbers<[1], [0], [0], [1], [0, 0, 1, 1], [], []>} : vector<32x16xf32>, vector<16x256xf32>, vector<32x256xf32> -> vector<32x256xf32>
    %c0_6 = arith.constant 0 : index
    %c0_7 = arith.constant 0 : index
    %12 = vector.load %arg4[%c0_6, %c0_7] : memref<1x256xf32, #tpu.memory_space<vmem>>, vector<1x256xf32>
    %13 = vector.broadcast %12 : vector<1x256xf32> to vector<32x256xf32>
    %14 = arith.addf %11, %13 : vector<32x256xf32>
    %c0_8 = arith.constant 0 : index
    %c0_9 = arith.constant 0 : index
    %15 = vector.load %arg5[%c0_8, %c0_9] : memref<32x256xf32, #tpu.memory_space<vmem>>, vector<32x256xf32>
    tpu.vector_store %arg5[%c0_8, %c0_9], %14 {strides = array<i32>} : memref<32x256xf32, #tpu.memory_space<vmem>>, vector<32x256xf32>,
    return
  }
  func.func @transform_0(%arg0: i32) -> (i32, i32) {
    %c0_i32 = arith.constant 0 : i32
    %c0_i32_0 = arith.constant 0 : i32
    return %c0_i32, %arg0 : i32, i32
  }
  func.func @transform_1(%arg0: i32) -> (i32, i32) {
    %c0_i32 = arith.constant 0 : i32
    %c0_i32_0 = arith.constant 0 : i32
    %c0_i32_1 = arith.constant 0 : i32
    return %c0_i32, %c0_i32_0 : i32, i32
  }
  func.func @transform_2(%arg0: i32) -> (i32, i32) {
    %c0_i32 = arith.constant 0 : i32
    %c0_i32_0 = arith.constant 0 : i32
    %c0_i32_1 = arith.constant 0 : i32
    return %c0_i32, %c0_i32_0 : i32, i32
  }
  func.func @transform_3(%arg0: i32) -> (i32, i32) {
    %c0_i32 = arith.constant 0 : i32
    %c0_i32_0 = arith.constant 0 : i32
    %c0_i32_1 = arith.constant 0 : i32
    return %c0_i32, %c0_i32_0 : i32, i32
  }
  func.func @transform_4(%arg0: i32) -> (i32, i32) {
    %c0_i32 = arith.constant 0 : i32
    %c0_i32_0 = arith.constant 0 : i32
    return %arg0, %c0_i32 : i32, i32
  }
}

module attributes {stable_mosaic.version = 11 : i64} {
  func.func @kernel(%arg0: i32, %arg1: memref<128x16xbf16, #tpu.memory_space<vmem>>, %arg2: memref<32x128xbf16, #tpu.memory_space<vmem>>, %arg3: memref<16x256xf32, #tpu.memory_space<vmem>>, %arg4: memref<1x256xf32, #tpu.memory_space<vmem>>, %arg5: memref<32x256xf32, #tpu.memory_space<vmem>>) attributes {dimension_semantics = [#tpu.dimension_semantics<parallel>], iteration_bounds = array<i64: 1>, scalar_prefetch = 0 : i64, scratch_operands = 0 : i64, tpu.core_type = #tpu.core_type<tc>, window_params = [{transform_indices = @transform_0, window_bounds = array<i64: 128, 16>}, {pipeline_mode = #tpu.pipeline_mode<synchronous>, transform_indices = @transform_1, window_bounds = array<i64: 32, 128>}, {pipeline_mode = #tpu.pipeline_mode<synchronous>, transform_indices = @transform_2, window_bounds = array<i64: 16, 256>}, {pipeline_mode = #tpu.pipeline_mode<synchronous>, transform_indices = @transform_3, window_bounds = array<i64: 1, 256>}, {transform_indices = @transform_4, window_bounds = array<i64: 32, 256>}]} {
    %c0 = arith.constant 0 : index
    %c0_0 = arith.constant 0 : index
    %0 = vector.load %arg2[%c0, %c0_0] : memref<32x128xbf16, #tpu.memory_space<vmem>>, vector<32x128xbf16>
    %c0_1 = arith.constant 0 : index
    %c0_2 = arith.constant 0 : index
    %1 = vector.load %arg1[%c0_1, %c0_2] : memref<128x16xbf16, #tpu.memory_space<vmem>>, vector<128x16xbf16>
    %cst = arith.constant dense<0.000000e+00> : vector<32x16xf32>
    %2 = tpu.matmul %0, %1, %cst {dimension_numbers = #tpu.dot_dimension_numbers<[1], [0], [0], [1], [0, 0, 1, 1], [], []>} : vector<32x128xbf16>, vector<128x16xbf16>, vector<32x16xf32> -> vector<32x16xf32>
    %3 = vector.extract_strided_slice %2 {offsets = [0, 0], sizes = [16, 8], strides = [1, 1]} : vector<32x16xf32> to vector<16x8xf32>
    %4 = vector.extract_strided_slice %2 {offsets = [16, 0], sizes = [16, 8], strides = [1, 1]} : vector<32x16xf32> to vector<16x8xf32>
    %5 = tpu.concatenate %3, %4 in 1 : vector<16x8xf32>, vector<16x8xf32> -> vector<16x16xf32>
    %6 = vector.extract_strided_slice %2 {offsets = [0, 8], sizes = [16, 8], strides = [1, 1]} : vector<32x16xf32> to vector<16x8xf32>
    %7 = vector.extract_strided_slice %2 {offsets = [16, 8], sizes = [16, 8], strides = [1, 1]} : vector<32x16xf32> to vector<16x8xf32>
    %8 = tpu.concatenate %6, %7 in 1 : vector<16x8xf32>, vector<16x8xf32> -> vector<16x16xf32>
    %9 = tpu.concatenate %5, %8 in 0 : vector<16x16xf32>, vector<16x16xf32> -> vector<32x16xf32>
    %c0_3 = arith.constant 0 : index
    %c0_4 = arith.constant 0 : index
    %10 = vector.load %arg3[%c0_3, %c0_4] : memref<16x256xf32, #tpu.memory_space<vmem>>, vector<16x256xf32>
    %cst_5 = arith.constant dense<0.000000e+00> : vector<32x256xf32>
    %11 = tpu.matmul %9, %10, %cst_5 {dimension_numbers = #tpu.dot_dimension_numbers<[1], [0], [0], [1], [0, 0, 1, 1], [], []>} : vector<32x16xf32>, vector<16x256xf32>, vector<32x256xf32> -> vector<32x256xf32>
    %c0_6 = arith.constant 0 : index
    %c0_7 = arith.constant 0 : index
    %12 = vector.load %arg4[%c0_6, %c0_7] : memref<1x256xf32, #tpu.memory_space<vmem>>, vector<1x256xf32>
    %13 = vector.broadcast %12 : vector<1x256xf32> to vector<32x256xf32>
    %14 = arith.addf %11, %13 : vector<32x256xf32>
    %c0_8 = arith.constant 0 : index
    %c0_9 = arith.constant 0 : index
    %15 = vector.load %arg5[%c0_8, %c0_9] : memref<32x256xf32, #tpu.memory_space<vmem>>, vector<32x256xf32>
    tpu.vector_store %arg5[%c0_8, %c0_9], %14 {strides = array<i32>} : memref<32x256xf32, #tpu.memory_space<vmem>>, vector<32x256xf32>,
    return
  }
  func.func @transform_0(%arg0: i32) -> (i32, i32) {
    %c0_i32 = arith.constant 0 : i32
    %c0_i32_0 = arith.constant 0 : i32
    return %c0_i32, %arg0 : i32, i32
  }
  func.func @transform_1(%arg0: i32) -> (i32, i32) {
    %c0_i32 = arith.constant 0 : i32
    %c0_i32_0 = arith.constant 0 : i32
    %c0_i32_1 = arith.constant 0 : i32
    return %c0_i32, %c0_i32_0 : i32, i32
  }
  func.func @transform_2(%arg0: i32) -> (i32, i32) {
    %c0_i32 = arith.constant 0 : i32
    %c0_i32_0 = arith.constant 0 : i32
    %c0_i32_1 = arith.constant 0 : i32
    return %c0_i32, %c0_i32_0 : i32, i32
  }
  func.func @transform_3(%arg0: i32) -> (i32, i32) {
    %c0_i32 = arith.constant 0 : i32
    %c0_i32_0 = arith.constant 0 : i32
    %c0_i32_1 = arith.constant 0 : i32
    return %c0_i32, %c0_i32_0 : i32, i32
  }
  func.func @transform_4(%arg0: i32) -> (i32, i32) {
    %c0_i32 = arith.constant 0 : i32
    %c0_i32_0 = arith.constant 0 : i32
    return %arg0, %c0_i32 : i32, i32
  }
}

</mosaic_0001>

<llo_original>
// kernel: tpu_custom_call.1
$region0: #{tpu_custom_call.1}
  #allocation0 [shape = 'u32[]', space=smem, size = 0x4, offset = 0x4, fixed_abs, tag = 'smem constant byte address 0x4 - core index']
  #allocation1 [shape = 'u32[72,128]{1,0:T(1,128)}', space=vmem, size = 0x9000, scoped, tag = 'internal scratch']
  %s0 = inlined_call_operand.vmem [shape: bf16[128,16], index: 0, kind: input, shape index: {}]
  %s1 = inlined_call_operand.vmem [shape: bf16[32,128], index: 1, kind: input, shape index: {}]
  %s2 = inlined_call_operand.vmem [shape: f32[16,256], index: 2, kind: input, shape index: {}]
  %s3 = inlined_call_operand.vmem [shape: f32[1,256], index: 3, kind: input, shape index: {}]
  %s4 = inlined_call_operand.hbm [shape: f32[32,256], index: 4, kind: output, shape index: {}]
  %s5 = sld [smem:[#allocation0]]
  $region26: #{tpu_custom_call.1} parent=0
    _
  %s7 = ssub.s32 1, %s5
  %s8 = scalar_select 0, %s7, %s5
  $region1: #{tpu_custom_call.1} parent=0
    #allocation2 [shape = 'u8[32768]{0}', space=vmem, size = 0x8000, scoped, tag = 'output window, operand 0, single buffered']
    #allocation3 [shape = 's32[1]{0}', space=sflag, size = 0x4, scoped, tag = 'scoped memory for tpu_custom_call.1']
    %9 = vsyncpa [#allocation3], 0
    // Predicated region
    $region2: #{tpu_custom_call.1} parent=1 // pred_check
      _
    $region3: #{tpu_custom_call.1} parent=1 // pred_check_branch
      %11 = sbr.rel (0) target = $region5
    $region4: #{tpu_custom_call.1} parent=1 // pred_region
      _
    $region5: #{tpu_custom_call.1} parent=1 // pred_fallthru
      _
    // Predicated region
    $region6: #{tpu_custom_call.1} parent=1 // pred_check
      _
    $region7: #{tpu_custom_call.1} parent=1 // pred_check_branch
      %13 = sbr.rel (0) target = $region9
    $region8: #{tpu_custom_call.1} parent=1 // pred_region
      _
    $region9: #{tpu_custom_call.1} parent=1 // pred_fallthru
      _
    // Predicated region
    $region10: #{tpu_custom_call.1} parent=1 // pred_check
      _
    $region11: #{tpu_custom_call.1} parent=1 // pred_check_branch
      %15 = sbr.rel (0) target = $region13
    $region12: #{tpu_custom_call.1} parent=1 // pred_region
      _
    $region13: #{tpu_custom_call.1} parent=1 // pred_fallthru
      _
    // Predicated region
    $region14: #{tpu_custom_call.1} parent=1 // pred_check
      _
    $region15: #{tpu_custom_call.1} parent=1 // pred_check_branch
      %17 = sbr.rel (0) target = $region17
    $region16: #{tpu_custom_call.1} parent=1 // pred_region
      _
    $region17: #{tpu_custom_call.1} parent=1 // pred_fallthru
      _
    %v18 = vld [vmem:[%s1] sm:$0xf]
    %v19 = vld [vmem:[%s1 + $0x4] sm:$0xf]
    %v20 = vld [vmem:[%s1 + $0x8] sm:$0xf]
    %v21 = vld [vmem:[%s1 + $0xc] sm:$0xf]
    %v22 = vld [vmem:[%s0] sm:$0xf]
    %v23 = vld [vmem:[%s0 + $0x4] sm:$0xf]
    %v24 = vld [vmem:[%s0 + $0x8] sm:$0xf]
    %v25 = vld [vmem:[%s0 + $0xc] sm:$0xf]
    %v26 = vld [vmem:[%s0 + $0x10] sm:$0xf]
    %v27 = vld [vmem:[%s0 + $0x14] sm:$0xf]
    %v28 = vld [vmem:[%s0 + $0x18] sm:$0xf]
    %v29 = vld [vmem:[%s0 + $0x1c] sm:$0xf]
    %v30 = vld [vmem:[%s0 + $0x20] sm:$0xf]
    %v31 = vld [vmem:[%s0 + $0x24] sm:$0xf]
    %v32 = vld [vmem:[%s0 + $0x28] sm:$0xf]
    %v33 = vld [vmem:[%s0 + $0x2c] sm:$0xf]
    %v34 = vld [vmem:[%s0 + $0x30] sm:$0xf]
    %v35 = vld [vmem:[%s0 + $0x34] sm:$0xf]
    %v36 = vld [vmem:[%s0 + $0x38] sm:$0xf]
    %v37 = vld [vmem:[%s0 + $0x3c] sm:$0xf]
    %v42 = vunpack.c.l.b16 %v18
    %v43 = vunpack.c.l.b16 %v19
    %v44 = vunpack.c.l.b16 %v20
    %v45 = vunpack.c.l.b16 %v21
    %v46 = vpack.c.b16 %v43, %v42
    %v47 = vpack.c.b16 %v45, %v44
    %v66 = vunpack.c.l.b16 %v22
    %v67 = vunpack.c.l.b16 %v23
    %v68 = vunpack.c.l.b16 %v24
    %v69 = vunpack.c.l.b16 %v25
    %v70 = vunpack.c.l.b16 %v26
    %v71 = vunpack.c.l.b16 %v27
    %v72 = vunpack.c.l.b16 %v28
    %v73 = vunpack.c.l.b16 %v29
    %v74 = vunpack.c.l.b16 %v30
    %v75 = vunpack.c.l.b16 %v31
    %v76 = vunpack.c.l.b16 %v32
    %v77 = vunpack.c.l.b16 %v33
    %v78 = vunpack.c.l.b16 %v34
    %v79 = vunpack.c.l.b16 %v35
    %v80 = vunpack.c.l.b16 %v36
    %v81 = vunpack.c.l.b16 %v37
    %v82 = vpack.c.b16 %v67, %v66
    %v83 = vpack.c.b16 %v69, %v68
    %v84 = vpack.c.b16 %v71, %v70
    %v85 = vpack.c.b16 %v73, %v72
    %v86 = vpack.c.b16 %v75, %v74
    %v87 = vpack.c.b16 %v77, %v76
    %v88 = vpack.c.b16 %v79, %v78
    %v89 = vpack.c.b16 %v81, %v80
    %98 = vmatpush.bf16.msra.mxu0 %v89
    %99 = vmatpush.bf16.msra.mxu0 %v88
    %100 = vmatpush.bf16.msra.mxu0 %v87
    %101 = vmatpush.bf16.msra.mxu0 %v86
    %102 = vmatpush.bf16.msra.mxu0 %v85
    %103 = vmatpush.bf16.msra.mxu0 %v84
    %104 = vmatpush.bf16.msra.mxu0 %v83
    %105 = vmatpush.bf16.msra.mxu0 %v82
    %106 = vmatmul.bf16.gmra.mxu0 %v46
    %v107 = vpop.f32.mrf.mxu0
    %v108 = vadd.f32 0.0, %v107
    %v109 = vpop.f32.mrf.mxu0
    %v110 = vadd.f32 0.0, %v109
    %111 = vmatmul.bf16.gmra.mxu0 %v47
    %v112 = vpop.f32.mrf.mxu0
    %v113 = vadd.f32 0.0, %v112
    %v114 = vpop.f32.mrf.mxu0
    %v115 = vadd.f32 0.0, %v114
    %116 = vdwg.mxu0
    %119 = vrot.lane.b32.xlu0 %v113, 8
    %v120 = vpop.permute.xlu0 %119
    %121 = vrot.lane.b32.xlu0 %v115, 8
    %v122 = vpop.permute.xlu0 %121
    %vm125 = vcmask 64512
    %v126 = vsel %vm125, %v108, %v120
    %v127 = vsel %vm125, %v110, %v122
    %130 = vrot.lane.b32.xlu0 %v108, 120
    %v131 = vpop.permute.xlu0 %130
    %132 = vrot.lane.b32.xlu0 %v110, 120
    %v133 = vpop.permute.xlu0 %132
    %v136 = vsel %vm125, %v131, %v113
    %v137 = vsel %vm125, %v133, %v115
    %v138 = vld [vmem:[%s2] sm:$0xff]
    %v139 = vld [vmem:[%s2 + $0x8] sm:$0xff]
    %v140 = vld [vmem:[%s2 + $0x10] sm:$0xff]
    %v141 = vld [vmem:[%s2 + $0x18] sm:$0xff]
    %v142 = vld [vmem:[%s3] sm:$0x3]
    %v144 = vperm.slane %v142, 0
    %v145 = vperm.slane %v142, 1
    %vm148 = vcmask 130048
    %v150 = vsel %vm148, %v126, 0
    %v153 = vsel %vm148, %v127, 0
    %v156 = vsel %vm148, %v136, 0
    %v159 = vsel %vm148, %v137, 0
    %161 = vmatpush.msra.mxu0 0.0
    %162 = vmatpush.msra.mxu0 0.0
    %163 = vmatpush.msra.mxu0 0.0
    %164 = vmatpush.msra.mxu0 0.0
    %165 = vmatpush.msra.mxu0 0.0
    %166 = vmatpush.msra.mxu0 0.0
    %167 = vmatpush.msra.mxu0 0.0
    %168 = vmatpush.msra.mxu0 0.0
    %169 = vmatpush.msra.mxu0 0.0
    %170 = vmatpush.msra.mxu0 0.0
    %171 = vmatpush.msra.mxu0 0.0
    %172 = vmatpush.msra.mxu0 0.0
    %173 = vmatpush.msra.mxu0 0.0
    %174 = vmatpush.msra.mxu0 0.0
    %175 = vmatpush.msra.mxu0 %v140
    %176 = vmatpush.msra.mxu0 %v138
    %177 = vmatmul.f32.gmra.mxu0 %v150
    %v178 = vpop.f32.mrf.mxu0
    %v179 = vadd.f32 %v144, %v178
    %180 = vmatmul.f32.gmra.mxu0 %v153
    %v181 = vpop.f32.mrf.mxu0
    %v182 = vadd.f32 %v144, %v181
    %183 = vmatmul.f32.gmra.mxu0 %v156
    %v184 = vpop.f32.mrf.mxu0
    %v185 = vadd.f32 %v144, %v184
    %186 = vmatmul.f32.gmra.mxu0 %v159
    %v187 = vpop.f32.mrf.mxu0
    %v188 = vadd.f32 %v144, %v187
    %189 = vdwg.mxu0
    %190 = vmatpush.msra.mxu0 0.0
    %191 = vmatpush.msra.mxu0 0.0
    %192 = vmatpush.msra.mxu0 0.0
    %193 = vmatpush.msra.mxu0 0.0
    %194 = vmatpush.msra.mxu0 0.0
    %195 = vmatpush.msra.mxu0 0.0
    %196 = vmatpush.msra.mxu0 0.0
    %197 = vmatpush.msra.mxu0 0.0
    %198 = vmatpush.msra.mxu0 0.0
    %199 = vmatpush.msra.mxu0 0.0
    %200 = vmatpush.msra.mxu0 0.0
    %201 = vmatpush.msra.mxu0 0.0
    %202 = vmatpush.msra.mxu0 0.0
    %203 = vmatpush.msra.mxu0 0.0
    %204 = vmatpush.msra.mxu0 %v141
    %205 = vmatpush.msra.mxu0 %v139
    %206 = vmatmul.f32.gmra.mxu0 %v150
    %v207 = vpop.f32.mrf.mxu0
    %v208 = vadd.f32 %v145, %v207
    %209 = vmatmul.f32.gmra.mxu0 %v153
    %v210 = vpop.f32.mrf.mxu0
    %v211 = vadd.f32 %v145, %v210
    %212 = vmatmul.f32.gmra.mxu0 %v156
    %v213 = vpop.f32.mrf.mxu0
    %v214 = vadd.f32 %v145, %v213
    %215 = vmatmul.f32.gmra.mxu0 %v159
    %v216 = vpop.f32.mrf.mxu0
    %v217 = vadd.f32 %v145, %v216
    %218 = vdwg.mxu0
    %219 = vst [vmem:[#allocation2] sm:$0xff] %v179
    %220 = vst [vmem:[#allocation2 + $0x8] sm:$0xff] %v208
    %221 = vst [vmem:[#allocation2 + $0x10] sm:$0xff] %v182
    %222 = vst [vmem:[#allocation2 + $0x18] sm:$0xff] %v211
    %223 = vst [vmem:[#allocation2 + $0x20] sm:$0xff] %v185
    %224 = vst [vmem:[#allocation2 + $0x28] sm:$0xff] %v214
    %225 = vst [vmem:[#allocation2 + $0x30] sm:$0xff] %v188
    %226 = vst [vmem:[#allocation2 + $0x38] sm:$0xff] %v217
    // Predicated region
    $region18: #{tpu_custom_call.1} parent=1 // pred_check
      _
    $region19: #{tpu_custom_call.1} parent=1 // pred_check_branch
      %228 = sbr.rel (0) target = $region21
    $region20: #{tpu_custom_call.1} parent=1 // pred_region
      %230 = vsyncadd [#allocation3], 0
      %s231 = sshll.u32 [#allocation2], 4
      %s232 = int_to_ptr.vmem [resolvable:$true] %s231
      %s233 = sshll.u32 %s4, 4
      %s234 = int_to_ptr.hbm [resolvable:$true] %s233
      %239 = dma.vmem_to_hbm [thread:$0]  %s232, 1024, %s234, [#allocation3], 256, 256, 16
    $region21: #{tpu_custom_call.1} parent=1 // pred_fallthru
      _
    // Predicated region
    $region22: #{tpu_custom_call.1} parent=1 // pred_check
      _
    $region23: #{tpu_custom_call.1} parent=1 // pred_check_branch
      %241 = sbr.rel (0) target = $region25
    $region24: #{tpu_custom_call.1} parent=1 // pred_region
      %243 = dma.done [#allocation3], 1024
    $region25: #{tpu_custom_call.1} parent=1 // pred_fallthru
      _
    %244 = vsyncpa [#allocation3], 1

// kernel: tpu_custom_call.1
$region0: #{tpu_custom_call.1}
  #allocation0 [shape = 'u32[]', space=smem, size = 0x4, offset = 0x4, fixed_abs, tag = 'smem constant byte address 0x4 - core index']
  #allocation1 [shape = 'u32[72,128]{1,0:T(1,128)}', space=vmem, size = 0x9000, scoped, tag = 'internal scratch']
  %s0 = inlined_call_operand.vmem [shape: bf16[128,16], index: 0, kind: input, shape index: {}]
  %s1 = inlined_call_operand.vmem [shape: bf16[32,128], index: 1, kind: input, shape index: {}]
  %s2 = inlined_call_operand.vmem [shape: f32[16,256], index: 2, kind: input, shape index: {}]
  %s3 = inlined_call_operand.vmem [shape: f32[1,256], index: 3, kind: input, shape index: {}]
  %s4 = inlined_call_operand.hbm [shape: f32[32,256], index: 4, kind: output, shape index: {}]
  %s5 = sld [smem:[#allocation0]]
  $region26: #{tpu_custom_call.1} parent=0
    _
  %s7 = ssub.s32 1, %s5
  %s8 = scalar_select 0, %s7, %s5
  $region1: #{tpu_custom_call.1} parent=0
    #allocation2 [shape = 'u8[32768]{0}', space=vmem, size = 0x8000, scoped, tag = 'output window, operand 0, single buffered']
    #allocation3 [shape = 's32[1]{0}', space=sflag, size = 0x4, scoped, tag = 'scoped memory for tpu_custom_call.1']
    %9 = vsyncpa [#allocation3], 0
    // Predicated region
    $region2: #{tpu_custom_call.1} parent=1 // pred_check
      _
    $region3: #{tpu_custom_call.1} parent=1 // pred_check_branch
      %11 = sbr.rel (0) target = $region5
    $region4: #{tpu_custom_call.1} parent=1 // pred_region
      _
    $region5: #{tpu_custom_call.1} parent=1 // pred_fallthru
      _
    // Predicated region
    $region6: #{tpu_custom_call.1} parent=1 // pred_check
      _
    $region7: #{tpu_custom_call.1} parent=1 // pred_check_branch
      %13 = sbr.rel (0) target = $region9
    $region8: #{tpu_custom_call.1} parent=1 // pred_region
      _
    $region9: #{tpu_custom_call.1} parent=1 // pred_fallthru
      _
    // Predicated region
    $region10: #{tpu_custom_call.1} parent=1 // pred_check
      _
    $region11: #{tpu_custom_call.1} parent=1 // pred_check_branch
      %15 = sbr.rel (0) target = $region13
    $region12: #{tpu_custom_call.1} parent=1 // pred_region
      _
    $region13: #{tpu_custom_call.1} parent=1 // pred_fallthru
      _
    // Predicated region
    $region14: #{tpu_custom_call.1} parent=1 // pred_check
      _
    $region15: #{tpu_custom_call.1} parent=1 // pred_check_branch
      %17 = sbr.rel (0) target = $region17
    $region16: #{tpu_custom_call.1} parent=1 // pred_region
      _
    $region17: #{tpu_custom_call.1} parent=1 // pred_fallthru
      _
    %v18 = vld [vmem:[%s1] sm:$0xf]
    %v19 = vld [vmem:[%s1 + $0x4] sm:$0xf]
    %v20 = vld [vmem:[%s1 + $0x8] sm:$0xf]
    %v21 = vld [vmem:[%s1 + $0xc] sm:$0xf]
    %v22 = vld [vmem:[%s0] sm:$0xf]
    %v23 = vld [vmem:[%s0 + $0x4] sm:$0xf]
    %v24 = vld [vmem:[%s0 + $0x8] sm:$0xf]
    %v25 = vld [vmem:[%s0 + $0xc] sm:$0xf]
    %v26 = vld [vmem:[%s0 + $0x10] sm:$0xf]
    %v27 = vld [vmem:[%s0 + $0x14] sm:$0xf]
    %v28 = vld [vmem:[%s0 + $0x18] sm:$0xf]
    %v29 = vld [vmem:[%s0 + $0x1c] sm:$0xf]
    %v30 = vld [vmem:[%s0 + $0x20] sm:$0xf]
    %v31 = vld [vmem:[%s0 + $0x24] sm:$0xf]
    %v32 = vld [vmem:[%s0 + $0x28] sm:$0xf]
    %v33 = vld [vmem:[%s0 + $0x2c] sm:$0xf]
    %v34 = vld [vmem:[%s0 + $0x30] sm:$0xf]
    %v35 = vld [vmem:[%s0 + $0x34] sm:$0xf]
    %v36 = vld [vmem:[%s0 + $0x38] sm:$0xf]
    %v37 = vld [vmem:[%s0 + $0x3c] sm:$0xf]
    %v42 = vunpack.c.l.b16 %v18
    %v43 = vunpack.c.l.b16 %v19
    %v44 = vunpack.c.l.b16 %v20
    %v45 = vunpack.c.l.b16 %v21
    %v46 = vpack.c.b16 %v43, %v42
    %v47 = vpack.c.b16 %v45, %v44
    %v66 = vunpack.c.l.b16 %v22
    %v67 = vunpack.c.l.b16 %v23
    %v68 = vunpack.c.l.b16 %v24
    %v69 = vunpack.c.l.b16 %v25
    %v70 = vunpack.c.l.b16 %v26
    %v71 = vunpack.c.l.b16 %v27
    %v72 = vunpack.c.l.b16 %v28
    %v73 = vunpack.c.l.b16 %v29
    %v74 = vunpack.c.l.b16 %v30
    %v75 = vunpack.c.l.b16 %v31
    %v76 = vunpack.c.l.b16 %v32
    %v77 = vunpack.c.l.b16 %v33
    %v78 = vunpack.c.l.b16 %v34
    %v79 = vunpack.c.l.b16 %v35
    %v80 = vunpack.c.l.b16 %v36
    %v81 = vunpack.c.l.b16 %v37
    %v82 = vpack.c.b16 %v67, %v66
    %v83 = vpack.c.b16 %v69, %v68
    %v84 = vpack.c.b16 %v71, %v70
    %v85 = vpack.c.b16 %v73, %v72
    %v86 = vpack.c.b16 %v75, %v74
    %v87 = vpack.c.b16 %v77, %v76
    %v88 = vpack.c.b16 %v79, %v78
    %v89 = vpack.c.b16 %v81, %v80
    %98 = vmatpush.bf16.msra.mxu0 %v89
    %99 = vmatpush.bf16.msra.mxu0 %v88
    %100 = vmatpush.bf16.msra.mxu0 %v87
    %101 = vmatpush.bf16.msra.mxu0 %v86
    %102 = vmatpush.bf16.msra.mxu0 %v85
    %103 = vmatpush.bf16.msra.mxu0 %v84
    %104 = vmatpush.bf16.msra.mxu0 %v83
    %105 = vmatpush.bf16.msra.mxu0 %v82
    %106 = vmatmul.bf16.gmra.mxu0 %v46
    %v107 = vpop.f32.mrf.mxu0
    %v108 = vadd.f32 0.0, %v107
    %v109 = vpop.f32.mrf.mxu0
    %v110 = vadd.f32 0.0, %v109
    %111 = vmatmul.bf16.gmra.mxu0 %v47
    %v112 = vpop.f32.mrf.mxu0
    %v113 = vadd.f32 0.0, %v112
    %v114 = vpop.f32.mrf.mxu0
    %v115 = vadd.f32 0.0, %v114
    %116 = vdwg.mxu0
    %119 = vrot.lane.b32.xlu0 %v113, 8
    %v120 = vpop.permute.xlu0 %119
    %121 = vrot.lane.b32.xlu0 %v115, 8
    %v122 = vpop.permute.xlu0 %121
    %vm125 = vcmask 64512
    %v126 = vsel %vm125, %v108, %v120
    %v127 = vsel %vm125, %v110, %v122
    %130 = vrot.lane.b32.xlu0 %v108, 120
    %v131 = vpop.permute.xlu0 %130
    %132 = vrot.lane.b32.xlu0 %v110, 120
    %v133 = vpop.permute.xlu0 %132
    %v136 = vsel %vm125, %v131, %v113
    %v137 = vsel %vm125, %v133, %v115
    %v138 = vld [vmem:[%s2] sm:$0xff]
    %v139 = vld [vmem:[%s2 + $0x8] sm:$0xff]
    %v140 = vld [vmem:[%s2 + $0x10] sm:$0xff]
    %v141 = vld [vmem:[%s2 + $0x18] sm:$0xff]
    %v142 = vld [vmem:[%s3] sm:$0x3]
    %v144 = vperm.slane %v142, 0
    %v145 = vperm.slane %v142, 1
    %vm148 = vcmask 130048
    %v150 = vsel %vm148, %v126, 0
    %v153 = vsel %vm148, %v127, 0
    %v156 = vsel %vm148, %v136, 0
    %v159 = vsel %vm148, %v137, 0
    %161 = vmatpush.msra.mxu0 0.0
    %162 = vmatpush.msra.mxu0 0.0
    %163 = vmatpush.msra.mxu0 0.0
    %164 = vmatpush.msra.mxu0 0.0
    %165 = vmatpush.msra.mxu0 0.0
    %166 = vmatpush.msra.mxu0 0.0
    %167 = vmatpush.msra.mxu0 0.0
    %168 = vmatpush.msra.mxu0 0.0
    %169 = vmatpush.msra.mxu0 0.0
    %170 = vmatpush.msra.mxu0 0.0
    %171 = vmatpush.msra.mxu0 0.0
    %172 = vmatpush.msra.mxu0 0.0
    %173 = vmatpush.msra.mxu0 0.0
    %174 = vmatpush.msra.mxu0 0.0
    %175 = vmatpush.msra.mxu0 %v140
    %176 = vmatpush.msra.mxu0 %v138
    %177 = vmatmul.f32.gmra.mxu0 %v150
    %v178 = vpop.f32.mrf.mxu0
    %v179 = vadd.f32 %v144, %v178
    %180 = vmatmul.f32.gmra.mxu0 %v153
    %v181 = vpop.f32.mrf.mxu0
    %v182 = vadd.f32 %v144, %v181
    %183 = vmatmul.f32.gmra.mxu0 %v156
    %v184 = vpop.f32.mrf.mxu0
    %v185 = vadd.f32 %v144, %v184
    %186 = vmatmul.f32.gmra.mxu0 %v159
    %v187 = vpop.f32.mrf.mxu0
    %v188 = vadd.f32 %v144, %v187
    %189 = vdwg.mxu0
    %190 = vmatpush.msra.mxu0 0.0
    %191 = vmatpush.msra.mxu0 0.0
    %192 = vmatpush.msra.mxu0 0.0
    %193 = vmatpush.msra.mxu0 0.0
    %194 = vmatpush.msra.mxu0 0.0
    %195 = vmatpush.msra.mxu0 0.0
    %196 = vmatpush.msra.mxu0 0.0
    %197 = vmatpush.msra.mxu0 0.0
    %198 = vmatpush.msra.mxu0 0.0
    %199 = vmatpush.msra.mxu0 0.0
    %200 = vmatpush.msra.mxu0 0.0
    %201 = vmatpush.msra.mxu0 0.0
    %202 = vmatpush.msra.mxu0 0.0
    %203 = vmatpush.msra.mxu0 0.0
    %204 = vmatpush.msra.mxu0 %v141
    %205 = vmatpush.msra.mxu0 %v139
    %206 = vmatmul.f32.gmra.mxu0 %v150
    %v207 = vpop.f32.mrf.mxu0
    %v208 = vadd.f32 %v145, %v207
    %209 = vmatmul.f32.gmra.mxu0 %v153
    %v210 = vpop.f32.mrf.mxu0
    %v211 = vadd.f32 %v145, %v210
    %212 = vmatmul.f32.gmra.mxu0 %v156
    %v213 = vpop.f32.mrf.mxu0
    %v214 = vadd.f32 %v145, %v213
    %215 = vmatmul.f32.gmra.mxu0 %v159
    %v216 = vpop.f32.mrf.mxu0
    %v217 = vadd.f32 %v145, %v216
    %218 = vdwg.mxu0
    %219 = vst [vmem:[#allocation2] sm:$0xff] %v179
    %220 = vst [vmem:[#allocation2 + $0x8] sm:$0xff] %v208
    %221 = vst [vmem:[#allocation2 + $0x10] sm:$0xff] %v182
    %222 = vst [vmem:[#allocation2 + $0x18] sm:$0xff] %v211
    %223 = vst [vmem:[#allocation2 + $0x20] sm:$0xff] %v185
    %224 = vst [vmem:[#allocation2 + $0x28] sm:$0xff] %v214
    %225 = vst [vmem:[#allocation2 + $0x30] sm:$0xff] %v188
    %226 = vst [vmem:[#allocation2 + $0x38] sm:$0xff] %v217
    // Predicated region
    $region18: #{tpu_custom_call.1} parent=1 // pred_check
      _
    $region19: #{tpu_custom_call.1} parent=1 // pred_check_branch
      %228 = sbr.rel (0) target = $region21
    $region20: #{tpu_custom_call.1} parent=1 // pred_region
      %230 = vsyncadd [#allocation3], 0
      %s231 = sshll.u32 [#allocation2], 4
      %s232 = int_to_ptr.vmem [resolvable:$true] %s231
      %s233 = sshll.u32 %s4, 4
      %s234 = int_to_ptr.hbm [resolvable:$true] %s233
      %239 = dma.vmem_to_hbm [thread:$0]  %s232, 1024, %s234, [#allocation3], 256, 256, 16
    $region21: #{tpu_custom_call.1} parent=1 // pred_fallthru
      _
    // Predicated region
    $region22: #{tpu_custom_call.1} parent=1 // pred_check
      _
    $region23: #{tpu_custom_call.1} parent=1 // pred_check_branch
      %241 = sbr.rel (0) target = $region25
    $region24: #{tpu_custom_call.1} parent=1 // pred_region
      %243 = dma.done [#allocation3], 1024
    $region25: #{tpu_custom_call.1} parent=1 // pred_fallthru
      _
    %244 = vsyncpa [#allocation3], 1

</llo_original>
